<compile_context>
chip_gen: v7x
topology: tpu7x:2x2x1
jax: 0.10.0
libtpu: 0.0.40
codegen_flags: <defaults>
</compile_context>

<pallas_src>
import functools
from typing import NamedTuple

import jax
import jax.numpy as jnp
from jax import lax
from jax.experimental import pallas as pl
from jax.experimental.pallas import tpu as pltpu


def _round_up(a: int, m: int) -> int:
    return (a + m - 1) // m * m


# ----------------------------------------------------------------------------
# Kernel
# ----------------------------------------------------------------------------
def _fc_relu_kernel(x_ref, w_ref, b_ref, o_ref, acc_ref, *, precision):
    """One (tm, tn) output tile; K-reduction over grid axis 2.

    x_ref:   (tm, tk)        activations (compute dtype)
    w_ref:   (tk, tn)        weight block, already (in, out) = (K, N) layout
    b_ref:   (1, tn)         bias (f32), constant across the K axis
    o_ref:   (tm, tn)        output tile
    acc_ref: (tm, tn) f32    VMEM accumulator (resident across K steps)
    """
    k = pl.program_id(2)

    @pl.when(k == 0)
    def _init():
        acc_ref[...] = jnp.zeros_like(acc_ref)

    acc_ref[...] += jnp.dot(
        x_ref[...],
        w_ref[...],
        preferred_element_type=jnp.float32,
        precision=precision,
    )

    @pl.when(k == pl.num_programs(2) - 1)
    def _finalize():
        out = acc_ref[...] + b_ref[...]          # (tm, tn) + (1, tn) broadcast, f32
        o_ref[...] = jnp.maximum(out, 0.0).astype(o_ref.dtype)
    # TODO(synk): Dropout with p>0 would use pltpu.prng_seed/prng_random_bits in
    # the finalize branch; module default p=0 -> identity, so nothing to do.


# ----------------------------------------------------------------------------
# Planning (tile selection, generation-aware VMEM budget)
# ----------------------------------------------------------------------------
class FCPlan(NamedTuple):
    batch: int
    in_num: int
    out_num: int
    tm: int
    tn: int
    tk: int
    Mp: int
    Np: int
    Kp: int
    compute_dtype: str
    out_dtype: str
    vmem_limit_bytes: int


_TM_CANDS = (1024, 768, 512, 384, 256, 128)
_TN_CANDS = (2048, 1536, 1024, 768, 512, 256, 128)
_TK_CANDS = (1024, 512, 256, 128)


def _vmem_limit_bytes() -> int:
    """~96 MiB on v5e/v6e (128 MiB physical), ~48 MiB on v7x (64 MiB physical)."""
    default_cap = 128 * 1024 * 1024
    try:
        info = pltpu.get_tpu_info()
        cap = int(getattr(info, "vmem_capacity_bytes", default_cap))
    except Exception:
        cap = default_cap
    return cap * 3 // 4


def make_fc_plan(batch_size, in_num, out_num, *, compute_dtype=None,
                 out_dtype=jnp.float32) -> FCPlan:
    odt = jnp.dtype(out_dtype)
    cdt = jnp.dtype(compute_dtype) if compute_dtype is not None else odt
    in_b = cdt.itemsize
    out_b = odt.itemsize
    sub = 16 if in_b == 2 else 8          # sublane multiple (bf16 packs 2/row)

    vmem_limit = _vmem_limit_bytes()
    budget = int(vmem_limit * 0.6)        # headroom for compiler-internal scratch

    # --- M tiling -------------------------------------------------------------
    m_aligned = _round_up(batch_size, sub)
    if m_aligned <= 1024:
        # Small batch: one M tile -> the weight panel streams from HBM exactly once.
        tm, Mp = m_aligned, m_aligned
    else:
        tm = min(_TM_CANDS, key=lambda c: (_round_up(batch_size, c), -c))
        Mp = _round_up(batch_size, tm)
    single_m_tile = (Mp // tm == 1)

    # --- N / K tiling: minimize padding, then maximize tile, within VMEM ------
    def footprint(tm_, tn_, tk_):
        return (2 * tm_ * tk_ * in_b          # x (double-buffered)
                + 2 * tk_ * tn_ * in_b        # W (double-buffered)
                + 2 * tn_ * 4                 # bias (f32, double-buffered)
                + tm_ * tn_ * 4               # f32 accumulator scratch
                + 2 * tm_ * tn_ * out_b)      # output (double-buffered)

    def tn_key(c):
        np_ = _round_up(out_num, c)
        # minimal padding; if M is a single tile prefer >= 2 N tiles so both
        # TensorCores (v7x megacore) get work; then prefer larger tiles.
        want_split_penalty = 0 if (not single_m_tile or np_ // c >= 2) else 1
        return (np_, want_split_penalty, -c)

    def tk_key(c):
        return (_round_up(in_num, c), -c)

    tn = tk = None
    for cn in sorted(_TN_CANDS, key=tn_key):
        for ck in sorted(_TK_CANDS, key=tk_key):
            if footprint(tm, cn, ck) <= budget:
                tn, tk = cn, ck
                break
        if tn is not None:
            break
    if tn is None:          # always fits in practice; minimal fallback
        tn, tk = 128, 128

    Np = _round_up(out_num, tn)
    Kp = _round_up(in_num, tk)

    return FCPlan(batch=int(batch_size), in_num=int(in_num), out_num=int(out_num),
                  tm=int(tm), tn=int(tn), tk=int(tk),
                  Mp=int(Mp), Np=int(Np), Kp=int(Kp),
                  compute_dtype=str(cdt), out_dtype=str(odt),
                  vmem_limit_bytes=int(vmem_limit))


# ----------------------------------------------------------------------------
# One-time parameter preparation (do this at load time, NOT per call)
# ----------------------------------------------------------------------------
def prepare_fc_params(weight, bias, plan: FCPlan):
    """Cast weight to compute dtype, transpose to (in, out) and zero-pad to
    (Kp, Np); bias -> f32 (1, Np). Per-call path then touches W in HBM once."""
    cdt = jnp.dtype(plan.compute_dtype)
    out_num, in_num = weight.shape
    w_kn = jnp.pad(weight.T.astype(cdt),
                   ((0, plan.Kp - in_num), (0, plan.Np - out_num)))
    b_row = jnp.pad(bias.astype(jnp.float32),
                    (0, plan.Np - out_num)).reshape(1, plan.Np)
    return jax.block_until_ready(w_kn), jax.block_until_ready(b_row)


# ----------------------------------------------------------------------------
# Forward (cached, jitted per plan)
# ----------------------------------------------------------------------------
@functools.lru_cache(maxsize=None)
def _build_fc_forward(plan: FCPlan):
    cdt = jnp.dtype(plan.compute_dtype)
    odt = jnp.dtype(plan.out_dtype)
    tm, tn, tk = plan.tm, plan.tn, plan.tk
    grid = (plan.Mp // tm, plan.Np // tn, plan.Kp // tk)

    # fp32 parity with the PyTorch reference requires HIGHEST on the f32 path;
    # bf16 path uses the full-rate default.
    precision = lax.Precision.HIGHEST if cdt == jnp.dtype(jnp.float32) else None
    kernel = functools.partial(_fc_relu_kernel, precision=precision)

    # bytes_accessed accounts for re-streaming under this grid:
    # x is read once per N tile, W once per M tile.
    cost = pl.CostEstimate(
        flops=2 * plan.Mp * plan.Np * plan.Kp,
        transcendentals=0,
        bytes_accessed=(grid[1] * plan.Mp * plan.Kp * cdt.itemsize
                        + grid[0] * plan.Kp * plan.Np * cdt.itemsize
                        + grid[0] * plan.Np * 4
                        + plan.Mp * plan.Np * odt.itemsize),
    )

    # TODO(synk): if a profile shows exposed DMA when Kp//tk <= 2, add
    # pipeline_mode=pl.Buffered(3) to the x / weight BlockSpecs.
    call = pl.pallas_call(
        kernel,
        out_shape=jax.ShapeDtypeStruct((plan.Mp, plan.Np), odt),
        grid_spec=pltpu.PrefetchScalarGridSpec(
            num_scalar_prefetch=0,
            grid=grid,
            in_specs=[
                pl.BlockSpec((tm, tk), lambda i, j, k: (i, k)),   # x
                pl.BlockSpec((tk, tn), lambda i, j, k: (k, j)),   # W (K, N) layout
                pl.BlockSpec((1, tn), lambda i, j, k: (0, j)),    # bias (constant in k)
            ],
            out_specs=pl.BlockSpec((tm, tn), lambda i, j, k: (i, j)),
            scratch_shapes=[pltpu.VMEM((tm, tn), jnp.float32)],
        ),
        compiler_params=pltpu.CompilerParams(
            dimension_semantics=("parallel", "parallel", "arbitrary"),
            vmem_limit_bytes=plan.vmem_limit_bytes,
        ),
        cost_estimate=cost,
    )

    def forward(x, w_kn, b_row):
        B = x.shape[0]
        xc = x.astype(cdt)
        x_p = jnp.pad(xc, ((0, plan.Mp - B), (0, plan.Kp - plan.in_num)))
        out = call(x_p, w_kn, b_row)
        return out[:B, :plan.out_num]

    return jax.jit(forward)


def fc_forward(x, w_kn, b_row, plan: FCPlan):
    if x.ndim != 2 or x.shape[1] != plan.in_num:
        raise ValueError(f"expected x of shape (B, {plan.in_num}), got {x.shape}")
    if x.shape[0] > plan.Mp:
        raise ValueError(f"batch {x.shape[0]} exceeds planned Mp={plan.Mp}")
    return _build_fc_forward(plan)(x, w_kn, b_row)


def fully_connected_layer(x, weight, bias, *, compute_dtype=None):
    """Convenience one-shot API. For repeated calls, make_fc_plan /
    prepare_fc_params once, then call fc_forward."""
    plan = make_fc_plan(x.shape[0], weight.shape[1], weight.shape[0],
                        compute_dtype=compute_dtype, out_dtype=x.dtype)
    w_kn, b_row = prepare_fc_params(weight, bias, plan)
    return fc_forward(x, w_kn, b_row, plan)


# ----------------------------------------------------------------------------
# Demo / correctness check
# ----------------------------------------------------------------------------
if __name__ == "__main__":
    key = jax.random.PRNGKey(0)
    k_x, k_w, k_b = jax.random.split(key, 3)

    # Small demo shapes consistent with the module (in_num=32 -> out_num=64, batch=8).
    # NOTE: at this size the kernel is launch-overhead dominated; it validates the
    # tiled/pipelined path used for real layer sizes.
    B, in_num, out_num = 8, 32, 64

    x = jax.random.normal(k_x, (B, in_num), dtype=jnp.float32)
    bound = 1.0 / (in_num ** 0.5)
    weight = jax.random.uniform(k_w, (out_num, in_num), jnp.float32, -bound, bound)
    bias = jax.random.uniform(k_b, (out_num,), jnp.float32, -bound, bound)

    # Reference: PyTorch forward (Linear -> ReLU -> Dropout(p=0), no BN).
    ref = jnp.maximum(x @ weight.T + bias, 0.0)

    # f32 path (MXU HIGHEST precision for fp32 parity).
    plan32 = make_fc_plan(B, in_num, out_num,
                          compute_dtype=jnp.float32, out_dtype=jnp.float32)
    w32, b32 = prepare_fc_params(weight, bias, plan32)   # one-time param prep
    out = jax.block_until_ready(fc_forward(x, w32, b32, plan32))
    assert out.shape == (B, out_num)
    assert jnp.allclose(out, ref, atol=1e-5, rtol=1e-5)

    # bf16 compute path (weights pre-cast / pre-padded once; looser tolerance).
    plan16 = make_fc_plan(B, in_num, out_num,
                          compute_dtype=jnp.bfloat16, out_dtype=jnp.float32)
    w16, b16 = prepare_fc_params(weight, bias, plan16)
    out16 = jax.block_until_ready(fc_forward(x, w16, b16, plan16))
    assert out16.shape == (B, out_num)
    assert jnp.allclose(out16, ref, atol=5e-2, rtol=5e-2)

    # Convenience one-shot API also works.
    out_conv = jax.block_until_ready(fully_connected_layer(x, weight, bias))
    assert jnp.allclose(out_conv, ref, atol=1e-5, rtol=1e-5)

    print("KERNEL_OK")
</pallas_src>

<mosaic_0001>
module attributes {stable_mosaic.version = 11 : i64} {
  func.func @_fc_relu_kernel(%arg0: i32, %arg1: i32, %arg2: i32, %arg3: memref<8x128xf32, #tpu.memory_space<vmem>>, %arg4: memref<128x128xf32, #tpu.memory_space<vmem>>, %arg5: memref<1x128xf32, #tpu.memory_space<vmem>>, %arg6: memref<8x128xf32, #tpu.memory_space<vmem>>, %arg7: memref<8x128xf32, #tpu.memory_space<vmem>>) attributes {dimension_semantics = [#tpu.dimension_semantics<parallel>, #tpu.dimension_semantics<parallel>, #tpu.dimension_semantics<arbitrary>], iteration_bounds = array<i64: 1, 1, 1>, scalar_prefetch = 0 : i64, scratch_operands = 1 : i64, tpu.core_type = #tpu.core_type<tc>, window_params = [{transform_indices = @transform_0, window_bounds = array<i64: 8, 128>}, {transform_indices = @transform_1, window_bounds = array<i64: 128, 128>}, {transform_indices = @transform_2, window_bounds = array<i64: 1, 128>}, {transform_indices = @transform_3, window_bounds = array<i64: 8, 128>}]} {
    %c0_i32 = arith.constant 0 : i32
    %0 = arith.cmpi eq, %arg2, %c0_i32 : i32
    %1 = arith.extui %0 : i1 to i32
    %c0_i32_0 = arith.constant 0 : i32
    %2 = arith.cmpi ne, %1, %c0_i32_0 : i32
    scf.if %2 {
      %cst_10 = arith.constant 0.000000e+00 : f32
      %12 = vector.broadcast %cst_10 : f32 to vector<8x128xf32>
      %c0_11 = arith.constant 0 : index
      %c0_12 = arith.constant 0 : index
      %13 = vector.load %arg7[%c0_11, %c0_12] : memref<8x128xf32, #tpu.memory_space<vmem>>, vector<8x128xf32>
      tpu.vector_store %arg7[%c0_11, %c0_12], %12 {strides = array<i32>} : memref<8x128xf32, #tpu.memory_space<vmem>>, vector<8x128xf32>,
    } else {
    }
    %c0 = arith.constant 0 : index
    %c0_1 = arith.constant 0 : index
    %3 = vector.load %arg7[%c0, %c0_1] : memref<8x128xf32, #tpu.memory_space<vmem>>, vector<8x128xf32>
    %c0_2 = arith.constant 0 : index
    %c0_3 = arith.constant 0 : index
    %4 = vector.load %arg3[%c0_2, %c0_3] : memref<8x128xf32, #tpu.memory_space<vmem>>, vector<8x128xf32>
    %c0_4 = arith.constant 0 : index
    %c0_5 = arith.constant 0 : index
    %5 = vector.load %arg4[%c0_4, %c0_5] : memref<128x128xf32, #tpu.memory_space<vmem>>, vector<128x128xf32>
    %cst = arith.constant dense<0.000000e+00> : vector<8x128xf32>
    %6 = tpu.matmul %4, %5, %cst {dimension_numbers = #tpu.dot_dimension_numbers<[1], [0], [0], [1], [0, 0, 1, 1], [], []>, precision = #tpu.contract_precision<fp32>} : vector<8x128xf32>, vector<128x128xf32>, vector<8x128xf32> -> vector<8x128xf32>
    %7 = arith.addf %3, %6 : vector<8x128xf32>
    %c0_6 = arith.constant 0 : index
    %c0_7 = arith.constant 0 : index
    %8 = vector.load %arg7[%c0_6, %c0_7] : memref<8x128xf32, #tpu.memory_space<vmem>>, vector<8x128xf32>
    tpu.vector_store %arg7[%c0_6, %c0_7], %7 {strides = array<i32>} : memref<8x128xf32, #tpu.memory_space<vmem>>, vector<8x128xf32>,
    %c0_i32_8 = arith.constant 0 : i32
    %9 = arith.cmpi eq, %arg2, %c0_i32_8 : i32
    %10 = arith.extui %9 : i1 to i32
    %c0_i32_9 = arith.constant 0 : i32
    %11 = arith.cmpi ne, %10, %c0_i32_9 : i32
    scf.if %11 {
      %c0_10 = arith.constant 0 : index
      %c0_11 = arith.constant 0 : index
      %12 = vector.load %arg7[%c0_10, %c0_11] : memref<8x128xf32, #tpu.memory_space<vmem>>, vector<8x128xf32>
      %c0_12 = arith.constant 0 : index
      %c0_13 = arith.constant 0 : index
      %13 = vector.load %arg5[%c0_12, %c0_13] : memref<1x128xf32, #tpu.memory_space<vmem>>, vector<1x128xf32>
      %14 = vector.broadcast %13 : vector<1x128xf32> to vector<8x128xf32>
      %15 = arith.addf %12, %14 : vector<8x128xf32>
      %cst_14 = arith.constant 0.000000e+00 : f32
      %16 = vector.broadcast %cst_14 : f32 to vector<8x128xf32>
      %17 = arith.maximumf %15, %16 : vector<8x128xf32>
      %c0_15 = arith.constant 0 : index
      %c0_16 = arith.constant 0 : index
      %18 = vector.load %arg6[%c0_15, %c0_16] : memref<8x128xf32, #tpu.memory_space<vmem>>, vector<8x128xf32>
      tpu.vector_store %arg6[%c0_15, %c0_16], %17 {strides = array<i32>} : memref<8x128xf32, #tpu.memory_space<vmem>>, vector<8x128xf32>,
    } else {
    }
    return
  }
  func.func @transform_0(%arg0: i32, %arg1: i32, %arg2: i32) -> (i32, i32) {
    %c0_i32 = arith.constant 0 : i32
    return %arg0, %arg2 : i32, i32
  }
  func.func @transform_1(%arg0: i32, %arg1: i32, %arg2: i32) -> (i32, i32) {
    %c0_i32 = arith.constant 0 : i32
    return %arg2, %arg1 : i32, i32
  }
  func.func @transform_2(%arg0: i32, %arg1: i32, %arg2: i32) -> (i32, i32) {
    %c0_i32 = arith.constant 0 : i32
    %c0_i32_0 = arith.constant 0 : i32
    return %c0_i32, %arg1 : i32, i32
  }
  func.func @transform_3(%arg0: i32, %arg1: i32, %arg2: i32) -> (i32, i32) {
    %c0_i32 = arith.constant 0 : i32
    return %arg0, %arg1 : i32, i32
  }
}

</mosaic_0001>

<llo_original>
// kernel: forward.1
$region0: #{forward.1}
  #allocation0 [shape = 'u32[]', space=smem, size = 0x4, offset = 0x4, fixed_abs, tag = 'smem constant byte address 0x4 - core index']
  #allocation1 [shape = 'u32[144,128]{1,0:T(1,128)}', space=vmem, size = 0x12000, scoped, tag = 'internal scratch']
  #allocation2 [shape = 'f32[8,128]{1,0:T(8,128)}', space=vmem, size = 0x1000, scoped, tag = 'scratch operand']
  %s0 = inlined_call_operand.hbm [shape: f32[8,128], index: 0, kind: input, shape index: {}]
  %s1 = inlined_call_operand.hbm [shape: f32[128,128], index: 1, kind: input, shape index: {}]
  %s2 = inlined_call_operand.hbm [shape: f32[1,128], index: 2, kind: input, shape index: {}]
  %s3 = inlined_call_operand.hbm [shape: f32[8,128], index: 3, kind: output, shape index: {}]
  %s4 = sld [smem:[#allocation0]]
  $region42: #{forward.1} parent=0
    _
  %s6 = ssub.s32 1, %s4
  %s7 = scalar_select 0, %s6, %s4
  $region1: #{forward.1} parent=0
    #allocation3 [shape = 'u8[4096]{0}', space=vmem, size = 0x1000, scoped, tag = 'input window, operand 0, single buffered']
    #allocation4 [shape = 's32[1]{0}', space=sflag, size = 0x4, scoped, tag = 'scoped memory for forward.1']
    #allocation5 [shape = 's32[1]{0}', space=sflag, size = 0x4, scoped, tag = 'scoped memory for forward.1']
    #allocation6 [shape = 'u8[65536]{0}', space=vmem, size = 0x10000, scoped, tag = 'input window, operand 1, single buffered']
    #allocation7 [shape = 's32[1]{0}', space=sflag, size = 0x4, scoped, tag = 'scoped memory for forward.1']
    #allocation8 [shape = 'u8[512]{0}', space=vmem, size = 0x400, scoped, tag = 'input window, operand 2, single buffered']
    #allocation9 [shape = 'u8[4096]{0}', space=vmem, size = 0x1000, scoped, tag = 'output window, operand 0, single buffered']
    %8 = vsyncpa [#allocation4], 0
    %9 = vsyncpa [#allocation7], 0
    %10 = vsyncpa [#allocation5], 0
    // Predicated region
    $region2: #{forward.1} parent=1 // pred_check
      _
    $region3: #{forward.1} parent=1 // pred_check_branch
      %12 = sbr.rel (0) target = $region5
    $region4: #{forward.1} parent=1 // pred_region
      %s14 = ssub.s32 128, 128
      %15 = vsyncadd [#allocation4], %s14
      %s17 = sshll.u32 [#allocation3], 4
      %s18 = int_to_ptr.vmem [resolvable:$true] %s17
      %20 = dma.hbm_to_vmem [thread:$0]  %s0, 128, %s18, [#allocation4]
    $region5: #{forward.1} parent=1 // pred_fallthru
      _
    // Predicated region
    $region6: #{forward.1} parent=1 // pred_check
      _
    $region7: #{forward.1} parent=1 // pred_check_branch
      %22 = sbr.rel (0) target = $region9
    $region8: #{forward.1} parent=1 // pred_region
      %s24 = ssub.s32 2048, 2048
      %25 = vsyncadd [#allocation7], %s24
      %s26 = sshll.u32 [#allocation6], 4
      %s27 = int_to_ptr.vmem [resolvable:$true] %s26
      %32 = dma.hbm_to_vmem [thread:$0]  %s1, 2048, %s27, [#allocation7], 128, 128, 8
    $region9: #{forward.1} parent=1 // pred_fallthru
      _
    // Predicated region
    $region10: #{forward.1} parent=1 // pred_check
      _
    $region11: #{forward.1} parent=1 // pred_check_branch
      %34 = sbr.rel (0) target = $region13
    $region12: #{forward.1} parent=1 // pred_region
      %s36 = ssub.s32 16, 16
      %37 = vsyncadd [#allocation7], %s36
      %s39 = sshll.u32 [#allocation8], 4
      %s40 = int_to_ptr.vmem [resolvable:$true] %s39
      %42 = dma.hbm_to_vmem [thread:$0]  %s2, 16, %s40, [#allocation7]
    $region13: #{forward.1} parent=1 // pred_fallthru
      _
    // Predicated region
    $region14: #{forward.1} parent=1 // pred_check
      _
    $region15: #{forward.1} parent=1 // pred_check_branch
      %44 = sbr.rel (0) target = $region17
    $region16: #{forward.1} parent=1 // pred_region
      %45 = dma.done [#allocation4], 128
    $region17: #{forward.1} parent=1 // pred_fallthru
      _
    // Predicated region
    $region18: #{forward.1} parent=1 // pred_check
      _
    $region19: #{forward.1} parent=1 // pred_check_branch
      %47 = sbr.rel (0) target = $region21
    $region20: #{forward.1} parent=1 // pred_region
      %48 = dma.done [#allocation7], 2048
    $region21: #{forward.1} parent=1 // pred_fallthru
      _
    // Predicated region
    $region22: #{forward.1} parent=1 // pred_check
      _
    $region23: #{forward.1} parent=1 // pred_check_branch
      %50 = sbr.rel (0) target = $region25
    $region24: #{forward.1} parent=1 // pred_region
      %51 = dma.done [#allocation7], 16
    $region25: #{forward.1} parent=1 // pred_fallthru
      _
    %p52 = scmp.eq.s32.totalorder 0, 0
    // Predicated region
    $region26: #{forward.1} parent=1 // pred_check
      %p53 = pneg %p52
    $region27: #{forward.1} parent=1 // pred_check_branch
      %55 = sbr.rel (%p53) target = $region29
    $region28: #{forward.1} parent=1 // pred_region
      %56 = vst [vmem:[#allocation2] sm:$0xff] 0.0
    $region29: #{forward.1} parent=1 // pred_fallthru
      _
    %v57 = vld [vmem:[#allocation2] sm:$0xff]
    %v58 = vld [vmem:[#allocation3] sm:$0xff]
    %v59 = vld [vmem:[#allocation6] sm:$0xff]
    %v60 = vld [vmem:[#allocation6 + $0x8] sm:$0xff]
    %v61 = vld [vmem:[#allocation6 + $0x10] sm:$0xff]
    %v62 = vld [vmem:[#allocation6 + $0x18] sm:$0xff]
    %v63 = vld [vmem:[#allocation6 + $0x20] sm:$0xff]
    %v64 = vld [vmem:[#allocation6 + $0x28] sm:$0xff]
    %v65 = vld [vmem:[#allocation6 + $0x30] sm:$0xff]
    %v66 = vld [vmem:[#allocation6 + $0x38] sm:$0xff]
    %v67 = vld [vmem:[#allocation6 + $0x40] sm:$0xff]
    %v68 = vld [vmem:[#allocation6 + $0x48] sm:$0xff]
    %v69 = vld [vmem:[#allocation6 + $0x50] sm:$0xff]
    %v70 = vld [vmem:[#allocation6 + $0x58] sm:$0xff]
    %v71 = vld [vmem:[#allocation6 + $0x60] sm:$0xff]
    %v72 = vld [vmem:[#allocation6 + $0x68] sm:$0xff]
    %v73 = vld [vmem:[#allocation6 + $0x70] sm:$0xff]
    %v74 = vld [vmem:[#allocation6 + $0x78] sm:$0xff]
    %75 = vmatprep.subr.mxu0 0.0
    %v76 = vand.u32 %v59, 4294901760
    %77 = vmatpush1.msra.mxu0 %v76
    %78 = vmatprep.subr.mxu0 0.0
    %v79 = vand.u32 %v60, 4294901760
    %80 = vmatpush1.msra.mxu0 %v79
    %81 = vmatprep.subr.mxu0 0.0
    %v82 = vand.u32 %v61, 4294901760
    %83 = vmatpush1.msra.mxu0 %v82
    %84 = vmatprep.subr.mxu0 0.0
    %v85 = vand.u32 %v62, 4294901760
    %86 = vmatpush1.msra.mxu0 %v85
    %87 = vmatprep.subr.mxu0 0.0
    %v88 = vand.u32 %v63, 4294901760
    %89 = vmatpush1.msra.mxu0 %v88
    %90 = vmatprep.subr.mxu0 0.0
    %v91 = vand.u32 %v64, 4294901760
    %92 = vmatpush1.msra.mxu0 %v91
    %93 = vmatprep.subr.mxu0 0.0
    %v94 = vand.u32 %v65, 4294901760
    %95 = vmatpush1.msra.mxu0 %v94
    %96 = vmatprep.subr.mxu0 0.0
    %v97 = vand.u32 %v66, 4294901760
    %98 = vmatpush1.msra.mxu0 %v97
    %99 = vmatprep.subr.mxu0 0.0
    %v100 = vand.u32 %v67, 4294901760
    %101 = vmatpush1.msra.mxu0 %v100
    %102 = vmatprep.subr.mxu0 0.0
    %v103 = vand.u32 %v68, 4294901760
    %104 = vmatpush1.msra.mxu0 %v103
    %105 = vmatprep.subr.mxu0 0.0
    %v106 = vand.u32 %v69, 4294901760
    %107 = vmatpush1.msra.mxu0 %v106
    %108 = vmatprep.subr.mxu0 0.0
    %v109 = vand.u32 %v70, 4294901760
    %110 = vmatpush1.msra.mxu0 %v109
    %111 = vmatprep.subr.mxu0 0.0
    %v112 = vand.u32 %v71, 4294901760
    %113 = vmatpush1.msra.mxu0 %v112
    %114 = vmatprep.subr.mxu0 0.0
    %v115 = vand.u32 %v72, 4294901760
    %116 = vmatpush1.msra.mxu0 %v115
    %117 = vmatprep.subr.mxu0 0.0
    %v118 = vand.u32 %v73, 4294901760
    %119 = vmatpush1.msra.mxu0 %v118
    %120 = vmatprep.subr.mxu0 0.0
    %v121 = vand.u32 %v74, 4294901760
    %122 = vmatpush1.msra.mxu0 %v121
    %123 = vmatprep.subr.mxu0 0.0
    %124 = vmatpush1.msra.mxu0 0.0
    %125 = vmatprep.subr.mxu0 0.0
    %126 = vmatpush1.msra.mxu0 0.0
    %127 = vmatprep.subr.mxu0 0.0
    %128 = vmatpush1.msra.mxu0 0.0
    %129 = vmatprep.subr.mxu0 0.0
    %130 = vmatpush1.msra.mxu0 0.0
    %131 = vmatprep.subr.mxu0 0.0
    %132 = vmatpush1.msra.mxu0 0.0
    %133 = vmatprep.subr.mxu0 0.0
    %134 = vmatpush1.msra.mxu0 0.0
    %135 = vmatprep.subr.mxu0 0.0
    %136 = vmatpush1.msra.mxu0 0.0
    %137 = vmatprep.subr.mxu0 0.0
    %138 = vmatpush1.msra.mxu0 0.0
    %139 = vmatprep.subr.mxu0 0.0
    %140 = vmatpush1.msra.mxu0 0.0
    %141 = vmatprep.subr.mxu0 0.0
    %142 = vmatpush1.msra.mxu0 0.0
    %143 = vmatprep.subr.mxu0 0.0
    %144 = vmatpush1.msra.mxu0 0.0
    %145 = vmatprep.subr.mxu0 0.0
    %146 = vmatpush1.msra.mxu0 0.0
    %147 = vmatprep.subr.mxu0 0.0
    %148 = vmatpush1.msra.mxu0 0.0
    %149 = vmatprep.subr.mxu0 0.0
    %150 = vmatpush1.msra.mxu0 0.0
    %151 = vmatprep.subr.mxu0 0.0
    %152 = vmatpush1.msra.mxu0 0.0
    %153 = vmatprep.subr.mxu0 0.0
    %154 = vmatpush1.msra.mxu0 0.0
    %155 = vmatprep.mubr.f32.mxu0 0.0
    %v156 = vand.u32 %v58, 4294901760
    %v157 = vsub.f32 %v58, %v156
    %v158 = vand.u32 %v157, 4294901760
    %v159 = vsub.f32 %v157, %v158
    %v160 = vand.u32 %v159, 4294901760
    %161 = vmatmul.mubr.f32.gmra.mrb[0].mxu0 %v160
    %v162 = vpop.f32.mrb[0].mxu0
    %v163 = vadd.f32 0.0, %v162
    %v164 = vpop.f32.mrb[0].mxu0
    %165 = vdwg.mxu0
    %166 = vmatprep.subr.mxu0 0.0
    %v167 = vand.u32 %v59, 4294901760
    %v168 = vsub.f32 %v59, %v167
    %v169 = vand.u32 %v168, 4294901760
    %v170 = vsub.f32 %v168, %v169
    %v171 = vand.u32 %v170, 4294901760
    %172 = vmatpush1.msra.mxu0 %v171
    %173 = vmatprep.subr.mxu0 0.0
    %v174 = vand.u32 %v60, 4294901760
    %v175 = vsub.f32 %v60, %v174
    %v176 = vand.u32 %v175, 4294901760
    %v177 = vsub.f32 %v175, %v176
    %v178 = vand.u32 %v177, 4294901760
    %179 = vmatpush1.msra.mxu0 %v178
    %180 = vmatprep.subr.mxu0 0.0
    %v181 = vand.u32 %v61, 4294901760
    %v182 = vsub.f32 %v61, %v181
    %v183 = vand.u32 %v182, 4294901760
    %v184 = vsub.f32 %v182, %v183
    %v185 = vand.u32 %v184, 4294901760
    %186 = vmatpush1.msra.mxu0 %v185
    %187 = vmatprep.subr.mxu0 0.0
    %v188 = vand.u32 %v62, 4294901760
    %v189 = vsub.f32 %v62, %v188
    %v190 = vand.u32 %v189, 4294901760
    %v191 = vsub.f32 %v189, %v190
    %v192 = vand.u32 %v191, 4294901760
    %193 = vmatpush1.msra.mxu0 %v192
    %194 = vmatprep.subr.mxu0 0.0
    %v195 = vand.u32 %v63, 4294901760
    %v196 = vsub.f32 %v63, %v195
    %v197 = vand.u32 %v196, 4294901760
    %v198 = vsub.f32 %v196, %v197
    %v199 = vand.u32 %v198, 4294901760
    %200 = vmatpush1.msra.mxu0 %v199
    %201 = vmatprep.subr.mxu0 0.0
    %v202 = vand.u32 %v64, 4294901760
    %v203 = vsub.f32 %v64, %v202
    %v204 = vand.u32 %v203, 4294901760
    %v205 = vsub.f32 %v203, %v204
    %v206 = vand.u32 %v205, 4294901760
    %207 = vmatpush1.msra.mxu0 %v206
    %208 = vmatprep.subr.mxu0 0.0
    %v209 = vand.u32 %v65, 4294901760
    %v210 = vsub.f32 %v65, %v209
    %v211 = vand.u32 %v210, 4294901760
    %v212 = vsub.f32 %v210, %v211
    %v213 = vand.u32 %v212, 4294901760
    %214 = vmatpush1.msra.mxu0 %v213
    %215 = vmatprep.subr.mxu0 0.0
    %v216 = vand.u32 %v66, 4294901760
    %v217 = vsub.f32 %v66, %v216
    %v218 = vand.u32 %v217, 4294901760
    %v219 = vsub.f32 %v217, %v218
    %v220 = vand.u32 %v219, 4294901760
    %221 = vmatpush1.msra.mxu0 %v220
    %222 = vmatprep.subr.mxu0 0.0
    %v223 = vand.u32 %v67, 4294901760
    %v224 = vsub.f32 %v67, %v223
    %v225 = vand.u32 %v224, 4294901760
    %v226 = vsub.f32 %v224, %v225
    %v227 = vand.u32 %v226, 4294901760
    %228 = vmatpush1.msra.mxu0 %v227
    %229 = vmatprep.subr.mxu0 0.0
    %v230 = vand.u32 %v68, 4294901760
    %v231 = vsub.f32 %v68, %v230
    %v232 = vand.u32 %v231, 4294901760
    %v233 = vsub.f32 %v231, %v232
    %v234 = vand.u32 %v233, 4294901760
    %235 = vmatpush1.msra.mxu0 %v234
    %236 = vmatprep.subr.mxu0 0.0
    %v237 = vand.u32 %v69, 4294901760
    %v238 = vsub.f32 %v69, %v237
    %v239 = vand.u32 %v238, 4294901760
    %v240 = vsub.f32 %v238, %v239
    %v241 = vand.u32 %v240, 4294901760
    %242 = vmatpush1.msra.mxu0 %v241
    %243 = vmatprep.subr.mxu0 0.0
    %v244 = vand.u32 %v70, 4294901760
    %v245 = vsub.f32 %v70, %v244
    %v246 = vand.u32 %v245, 4294901760
    %v247 = vsub.f32 %v245, %v246
    %v248 = vand.u32 %v247, 4294901760
    %249 = vmatpush1.msra.mxu0 %v248
    %250 = vmatprep.subr.mxu0 0.0
    %v251 = vand.u32 %v71, 4294901760
    %v252 = vsub.f32 %v71, %v251
    %v253 = vand.u32 %v252, 4294901760
    %v254 = vsub.f32 %v252, %v253
    %v255 = vand.u32 %v254, 4294901760
    %256 = vmatpush1.msra.mxu0 %v255
    %257 = vmatprep.subr.mxu0 0.0
    %v258 = vand.u32 %v72, 4294901760
    %v259 = vsub.f32 %v72, %v258
    %v260 = vand.u32 %v259, 4294901760
    %v261 = vsub.f32 %v259, %v260
    %v262 = vand.u32 %v261, 4294901760
    %263 = vmatpush1.msra.mxu0 %v262
    %264 = vmatprep.subr.mxu0 0.0
    %v265 = vand.u32 %v73, 4294901760
    %v266 = vsub.f32 %v73, %v265
    %v267 = vand.u32 %v266, 4294901760
    %v268 = vsub.f32 %v266, %v267
    %v269 = vand.u32 %v268, 4294901760
    %270 = vmatpush1.msra.mxu0 %v269
    %271 = vmatprep.subr.mxu0 0.0
    %v272 = vand.u32 %v74, 4294901760
    %v273 = vsub.f32 %v74, %v272
    %v274 = vand.u32 %v273, 4294901760
    %v275 = vsub.f32 %v273, %v274
    %v276 = vand.u32 %v275, 4294901760
    %277 = vmatpush1.msra.mxu0 %v276
    %278 = vmatprep.subr.mxu0 0.0
    %279 = vmatpush1.msra.mxu0 0.0
    %280 = vmatprep.subr.mxu0 0.0
    %281 = vmatpush1.msra.mxu0 0.0
    %282 = vmatprep.subr.mxu0 0.0
    %283 = vmatpush1.msra.mxu0 0.0
    %284 = vmatprep.subr.mxu0 0.0
    %285 = vmatpush1.msra.mxu0 0.0
    %286 = vmatprep.subr.mxu0 0.0
    %287 = vmatpush1.msra.mxu0 0.0
    %288 = vmatprep.subr.mxu0 0.0
    %289 = vmatpush1.msra.mxu0 0.0
    %290 = vmatprep.subr.mxu0 0.0
    %291 = vmatpush1.msra.mxu0 0.0
    %292 = vmatprep.subr.mxu0 0.0
    %293 = vmatpush1.msra.mxu0 0.0
    %294 = vmatprep.subr.mxu0 0.0
    %295 = vmatpush1.msra.mxu0 0.0
    %296 = vmatprep.subr.mxu0 0.0
    %297 = vmatpush1.msra.mxu0 0.0
    %298 = vmatprep.subr.mxu0 0.0
    %299 = vmatpush1.msra.mxu0 0.0
    %300 = vmatprep.subr.mxu0 0.0
    %301 = vmatpush1.msra.mxu0 0.0
    %302 = vmatprep.subr.mxu0 0.0
    %303 = vmatpush1.msra.mxu0 0.0
    %304 = vmatprep.subr.mxu0 0.0
    %305 = vmatpush1.msra.mxu0 0.0
    %306 = vmatprep.subr.mxu0 0.0
    %307 = vmatpush1.msra.mxu0 0.0
    %308 = vmatprep.subr.mxu0 0.0
    %309 = vmatpush1.msra.mxu0 0.0
    %310 = vmatprep.mubr.f32.mxu0 0.0
    %v311 = vand.u32 %v58, 4294901760
    %312 = vmatmul.mubr.f32.gmra.mrb[0].mxu0 %v311
    %v313 = vpop.f32.mrb[0].mxu0
    %v314 = vadd.f32 %v163, %v313
    %v315 = vpop.f32.mrb[0].mxu0
    %316 = vdwg.mxu0
    %317 = vmatprep.subr.mxu0 0.0
    %v318 = vand.u32 %v59, 4294901760
    %v319 = vsub.f32 %v59, %v318
    %320 = vmatpush1.msra.mxu0 %v319
    %321 = vmatprep.subr.mxu0 0.0
    %v322 = vand.u32 %v60, 4294901760
    %v323 = vsub.f32 %v60, %v322
    %324 = vmatpush1.msra.mxu0 %v323
    %325 = vmatprep.subr.mxu0 0.0
    %v326 = vand.u32 %v61, 4294901760
    %v327 = vsub.f32 %v61, %v326
    %328 = vmatpush1.msra.mxu0 %v327
    %329 = vmatprep.subr.mxu0 0.0
    %v330 = vand.u32 %v62, 4294901760
    %v331 = vsub.f32 %v62, %v330
    %332 = vmatpush1.msra.mxu0 %v331
    %333 = vmatprep.subr.mxu0 0.0
    %v334 = vand.u32 %v63, 4294901760
    %v335 = vsub.f32 %v63, %v334
    %336 = vmatpush1.msra.mxu0 %v335
    %337 = vmatprep.subr.mxu0 0.0
    %v338 = vand.u32 %v64, 4294901760
    %v339 = vsub.f32 %v64, %v338
    %340 = vmatpush1.msra.mxu0 %v339
    %341 = vmatprep.subr.mxu0 0.0
    %v342 = vand.u32 %v65, 4294901760
    %v343 = vsub.f32 %v65, %v342
    %344 = vmatpush1.msra.mxu0 %v343
    %345 = vmatprep.subr.mxu0 0.0
    %v346 = vand.u32 %v66, 4294901760
    %v347 = vsub.f32 %v66, %v346
    %348 = vmatpush1.msra.mxu0 %v347
    %349 = vmatprep.subr.mxu0 0.0
    %v350 = vand.u32 %v67, 4294901760
    %v351 = vsub.f32 %v67, %v350
    %352 = vmatpush1.msra.mxu0 %v351
    %353 = vmatprep.subr.mxu0 0.0
    %v354 = vand.u32 %v68, 4294901760
    %v355 = vsub.f32 %v68, %v354
    %356 = vmatpush1.msra.mxu0 %v355
    %357 = vmatprep.subr.mxu0 0.0
    %v358 = vand.u32 %v69, 4294901760
    %v359 = vsub.f32 %v69, %v358
    %360 = vmatpush1.msra.mxu0 %v359
    %361 = vmatprep.subr.mxu0 0.0
    %v362 = vand.u32 %v70, 4294901760
    %v363 = vsub.f32 %v70, %v362
    %364 = vmatpush1.msra.mxu0 %v363
    %365 = vmatprep.subr.mxu0 0.0
    %v366 = vand.u32 %v71, 4294901760
    %v367 = vsub.f32 %v71, %v366
    %368 = vmatpush1.msra.mxu0 %v367
    %369 = vmatprep.subr.mxu0 0.0
    %v370 = vand.u32 %v72, 4294901760
    %v371 = vsub.f32 %v72, %v370
    %372 = vmatpush1.msra.mxu0 %v371
    %373 = vmatprep.subr.mxu0 0.0
    %v374 = vand.u32 %v73, 4294901760
    %v375 = vsub.f32 %v73, %v374
    %376 = vmatpush1.msra.mxu0 %v375
    %377 = vmatprep.subr.mxu0 0.0
    %v378 = vand.u32 %v74, 4294901760
    %v379 = vsub.f32 %v74, %v378
    %380 = vmatpush1.msra.mxu0 %v379
    %381 = vmatprep.subr.mxu0 0.0
    %382 = vmatpush1.msra.mxu0 0.0
    %383 = vmatprep.subr.mxu0 0.0
    %384 = vmatpush1.msra.mxu0 0.0
    %385 = vmatprep.subr.mxu0 0.0
    %386 = vmatpush1.msra.mxu0 0.0
    %387 = vmatprep.subr.mxu0 0.0
    %388 = vmatpush1.msra.mxu0 0.0
    %389 = vmatprep.subr.mxu0 0.0
    %390 = vmatpush1.msra.mxu0 0.0
    %391 = vmatprep.subr.mxu0 0.0
    %392 = vmatpush1.msra.mxu0 0.0
    %393 = vmatprep.subr.mxu0 0.0
    %394 = vmatpush1.msra.mxu0 0.0
    %395 = vmatprep.subr.mxu0 0.0
    %396 = vmatpush1.msra.mxu0 0.0
    %397 = vmatprep.subr.mxu0 0.0
    %398 = vmatpush1.msra.mxu0 0.0
    %399 = vmatprep.subr.mxu0 0.0
    %400 = vmatpush1.msra.mxu0 0.0
    %401 = vmatprep.subr.mxu0 0.0
    %402 = vmatpush1.msra.mxu0 0.0
    %403 = vmatprep.subr.mxu0 0.0
    %404 = vmatpush1.msra.mxu0 0.0
    %405 = vmatprep.subr.mxu0 0.0
    %406 = vmatpush1.msra.mxu0 0.0
    %407 = vmatprep.subr.mxu0 0.0
    %408 = vmatpush1.msra.mxu0 0.0
    %409 = vmatprep.subr.mxu0 0.0
    %410 = vmatpush1.msra.mxu0 0.0
    %411 = vmatprep.subr.mxu0 0.0
    %412 = vmatpush1.msra.mxu0 0.0
    %413 = vmatprep.mubr.f32.mxu0 0.0
    %v414 = vand.u32 %v58, 4294901760
    %v415 = vsub.f32 %v58, %v414
    %416 = vmatmul.mubr.f32.gmra.mrb[0].mxu0 %v415
    %v417 = vpop.f32.mrb[0].mxu0
    %v418 = vadd.f32 %v314, %v417
    %v419 = vpop.f32.mrb[0].mxu0
    %420 = vdwg.mxu0
    %421 = vmatprep.subr.mxu0 0.0
    %v422 = vand.u32 %v59, 4294901760
    %423 = vmatpush1.msra.mxu0 %v422
    %424 = vmatprep.subr.mxu0 0.0
    %v425 = vand.u32 %v60, 4294901760
    %426 = vmatpush1.msra.mxu0 %v425
    %427 = vmatprep.subr.mxu0 0.0
    %v428 = vand.u32 %v61, 4294901760
    %429 = vmatpush1.msra.mxu0 %v428
    %430 = vmatprep.subr.mxu0 0.0
    %v431 = vand.u32 %v62, 4294901760
    %432 = vmatpush1.msra.mxu0 %v431
    %433 = vmatprep.subr.mxu0 0.0
    %v434 = vand.u32 %v63, 4294901760
    %435 = vmatpush1.msra.mxu0 %v434
    %436 = vmatprep.subr.mxu0 0.0
    %v437 = vand.u32 %v64, 4294901760
    %438 = vmatpush1.msra.mxu0 %v437
    %439 = vmatprep.subr.mxu0 0.0
    %v440 = vand.u32 %v65, 4294901760
    %441 = vmatpush1.msra.mxu0 %v440
    %442 = vmatprep.subr.mxu0 0.0
    %v443 = vand.u32 %v66, 4294901760
    %444 = vmatpush1.msra.mxu0 %v443
    %445 = vmatprep.subr.mxu0 0.0
    %v446 = vand.u32 %v67, 4294901760
    %447 = vmatpush1.msra.mxu0 %v446
    %448 = vmatprep.subr.mxu0 0.0
    %v449 = vand.u32 %v68, 4294901760
    %450 = vmatpush1.msra.mxu0 %v449
    %451 = vmatprep.subr.mxu0 0.0
    %v452 = vand.u32 %v69, 4294901760
    %453 = vmatpush1.msra.mxu0 %v452
    %454 = vmatprep.subr.mxu0 0.0
    %v455 = vand.u32 %v70, 4294901760
    %456 = vmatpush1.msra.mxu0 %v455
    %457 = vmatprep.subr.mxu0 0.0
    %v458 = vand.u32 %v71, 4294901760
    %459 = vmatpush1.msra.mxu0 %v458
    %460 = vmatprep.subr.mxu0 0.0
    %v461 = vand.u32 %v72, 4294901760
    %462 = vmatpush1.msra.mxu0 %v461
    %463 = vmatprep.subr.mxu0 0.0
    %v464 = vand.u32 %v73, 4294901760
    %465 = vmatpush1.msra.mxu0 %v464
    %466 = vmatprep.subr.mxu0 0.0
    %v467 = vand.u32 %v74, 4294901760
    %468 = vmatpush1.msra.mxu0 %v467
    %469 = vmatprep.subr.mxu0 0.0
    %470 = vmatpush1.msra.mxu0 0.0
    %471 = vmatprep.subr.mxu0 0.0
    %472 = vmatpush1.msra.mxu0 0.0
    %473 = vmatprep.subr.mxu0 0.0
    %474 = vmatpush1.msra.mxu0 0.0
    %475 = vmatprep.subr.mxu0 0.0
    %476 = vmatpush1.msra.mxu0 0.0
    %477 = vmatprep.subr.mxu0 0.0
    %478 = vmatpush1.msra.mxu0 0.0
    %479 = vmatprep.subr.mxu0 0.0
    %480 = vmatpush1.msra.mxu0 0.0
    %481 = vmatprep.subr.mxu0 0.0
    %482 = vmatpush1.msra.mxu0 0.0
    %483 = vmatprep.subr.mxu0 0.0
    %484 = vmatpush1.msra.mxu0 0.0
    %485 = vmatprep.subr.mxu0 0.0
    %486 = vmatpush1.msra.mxu0 0.0
    %487 = vmatprep.subr.mxu0 0.0
    %488 = vmatpush1.msra.mxu0 0.0
    %489 = vmatprep.subr.mxu0 0.0
    %490 = vmatpush1.msra.mxu0 0.0
    %491 = vmatprep.subr.mxu0 0.0
    %492 = vmatpush1.msra.mxu0 0.0
    %493 = vmatprep.subr.mxu0 0.0
    %494 = vmatpush1.msra.mxu0 0.0
    %495 = vmatprep.subr.mxu0 0.0
    %496 = vmatpush1.msra.mxu0 0.0
    %497 = vmatprep.subr.mxu0 0.0
    %498 = vmatpush1.msra.mxu0 0.0
    %499 = vmatprep.subr.mxu0 0.0
    %500 = vmatpush1.msra.mxu0 0.0
    %501 = vmatprep.mubr.f32.mxu0 0.0
    %v502 = vand.u32 %v58, 4294901760
    %v503 = vsub.f32 %v58, %v502
    %v504 = vand.u32 %v503, 4294901760
    %505 = vmatmul.mubr.f32.gmra.mrb[0].mxu0 %v504
    %v506 = vpop.f32.mrb[0].mxu0
    %v507 = vadd.f32 %v418, %v506
    %v508 = vpop.f32.mrb[0].mxu0
    %509 = vdwg.mxu0
    %510 = vmatprep.subr.mxu0 0.0
    %v511 = vand.u32 %v59, 4294901760
    %v512 = vsub.f32 %v59, %v511
    %v513 = vand.u32 %v512, 4294901760
    %514 = vmatpush1.msra.mxu0 %v513
    %515 = vmatprep.subr.mxu0 0.0
    %v516 = vand.u32 %v60, 4294901760
    %v517 = vsub.f32 %v60, %v516
    %v518 = vand.u32 %v517, 4294901760
    %519 = vmatpush1.msra.mxu0 %v518
    %520 = vmatprep.subr.mxu0 0.0
    %v521 = vand.u32 %v61, 4294901760
    %v522 = vsub.f32 %v61, %v521
    %v523 = vand.u32 %v522, 4294901760
    %524 = vmatpush1.msra.mxu0 %v523
    %525 = vmatprep.subr.mxu0 0.0
    %v526 = vand.u32 %v62, 4294901760
    %v527 = vsub.f32 %v62, %v526
    %v528 = vand.u32 %v527, 4294901760
    %529 = vmatpush1.msra.mxu0 %v528
    %530 = vmatprep.subr.mxu0 0.0
    %v531 = vand.u32 %v63, 4294901760
    %v532 = vsub.f32 %v63, %v531
    %v533 = vand.u32 %v532, 4294901760
    %534 = vmatpush1.msra.mxu0 %v533
    %535 = vmatprep.subr.mxu0 0.0
    %v536 = vand.u32 %v64, 4294901760
    %v537 = vsub.f32 %v64, %v536
    %v538 = vand.u32 %v537, 4294901760
    %539 = vmatpush1.msra.mxu0 %v538
    %540 = vmatprep.subr.mxu0 0.0
    %v541 = vand.u32 %v65, 4294901760
    %v542 = vsub.f32 %v65, %v541
    %v543 = vand.u32 %v542, 4294901760
    %544 = vmatpush1.msra.mxu0 %v543
    %545 = vmatprep.subr.mxu0 0.0
    %v546 = vand.u32 %v66, 4294901760
    %v547 = vsub.f32 %v66, %v546
    %v548 = vand.u32 %v547, 4294901760
    %549 = vmatpush1.msra.mxu0 %v548
    %550 = vmatprep.subr.mxu0 0.0
    %v551 = vand.u32 %v67, 4294901760
    %v552 = vsub.f32 %v67, %v551
    %v553 = vand.u32 %v552, 4294901760
    %554 = vmatpush1.msra.mxu0 %v553
    %555 = vmatprep.subr.mxu0 0.0
    %v556 = vand.u32 %v68, 4294901760
    %v557 = vsub.f32 %v68, %v556
    %v558 = vand.u32 %v557, 4294901760
    %559 = vmatpush1.msra.mxu0 %v558
    %560 = vmatprep.subr.mxu0 0.0
    %v561 = vand.u32 %v69, 4294901760
    %v562 = vsub.f32 %v69, %v561
    %v563 = vand.u32 %v562, 4294901760
    %564 = vmatpush1.msra.mxu0 %v563
    %565 = vmatprep.subr.mxu0 0.0
    %v566 = vand.u32 %v70, 4294901760
    %v567 = vsub.f32 %v70, %v566
    %v568 = vand.u32 %v567, 4294901760
    %569 = vmatpush1.msra.mxu0 %v568
    %570 = vmatprep.subr.mxu0 0.0
    %v571 = vand.u32 %v71, 4294901760
    %v572 = vsub.f32 %v71, %v571
    %v573 = vand.u32 %v572, 4294901760
    %574 = vmatpush1.msra.mxu0 %v573
    %575 = vmatprep.subr.mxu0 0.0
    %v576 = vand.u32 %v72, 4294901760
    %v577 = vsub.f32 %v72, %v576
    %v578 = vand.u32 %v577, 4294901760
    %579 = vmatpush1.msra.mxu0 %v578
    %580 = vmatprep.subr.mxu0 0.0
    %v581 = vand.u32 %v73, 4294901760
    %v582 = vsub.f32 %v73, %v581
    %v583 = vand.u32 %v582, 4294901760
    %584 = vmatpush1.msra.mxu0 %v583
    %585 = vmatprep.subr.mxu0 0.0
    %v586 = vand.u32 %v74, 4294901760
    %v587 = vsub.f32 %v74, %v586
    %v588 = vand.u32 %v587, 4294901760
    %589 = vmatpush1.msra.mxu0 %v588
    %590 = vmatprep.subr.mxu0 0.0
    %591 = vmatpush1.msra.mxu0 0.0
    %592 = vmatprep.subr.mxu0 0.0
    %593 = vmatpush1.msra.mxu0 0.0
    %594 = vmatprep.subr.mxu0 0.0
    %595 = vmatpush1.msra.mxu0 0.0
    %596 = vmatprep.subr.mxu0 0.0
    %597 = vmatpush1.msra.mxu0 0.0
    %598 = vmatprep.subr.mxu0 0.0
    %599 = vmatpush1.msra.mxu0 0.0
    %600 = vmatprep.subr.mxu0 0.0
    %601 = vmatpush1.msra.mxu0 0.0
    %602 = vmatprep.subr.mxu0 0.0
    %603 = vmatpush1.msra.mxu0 0.0
    %604 = vmatprep.subr.mxu0 0.0
    %605 = vmatpush1.msra.mxu0 0.0
    %606 = vmatprep.subr.mxu0 0.0
    %607 = vmatpush1.msra.mxu0 0.0
    %608 = vmatprep.subr.mxu0 0.0
    %609 = vmatpush1.msra.mxu0 0.0
    %610 = vmatprep.subr.mxu0 0.0
    %611 = vmatpush1.msra.mxu0 0.0
    %612 = vmatprep.subr.mxu0 0.0
    %613 = vmatpush1.msra.mxu0 0.0
    %614 = vmatprep.subr.mxu0 0.0
    %615 = vmatpush1.msra.mxu0 0.0
    %616 = vmatprep.subr.mxu0 0.0
    %617 = vmatpush1.msra.mxu0 0.0
    %618 = vmatprep.subr.mxu0 0.0
    %619 = vmatpush1.msra.mxu0 0.0
    %620 = vmatprep.subr.mxu0 0.0
    %621 = vmatpush1.msra.mxu0 0.0
    %622 = vmatprep.mubr.f32.mxu0 0.0
    %v623 = vand.u32 %v58, 4294901760
    %624 = vmatmul.mubr.f32.gmra.mrb[0].mxu0 %v623
    %v625 = vpop.f32.mrb[0].mxu0
    %v626 = vadd.f32 %v507, %v625
    %v627 = vpop.f32.mrb[0].mxu0
    %628 = vdwg.mxu0
    %629 = vmatprep.subr.mxu0 0.0
    %v630 = vand.u32 %v59, 4294901760
    %631 = vmatpush1.msra.mxu0 %v630
    %632 = vmatprep.subr.mxu0 0.0
    %v633 = vand.u32 %v60, 4294901760
    %634 = vmatpush1.msra.mxu0 %v633
    %635 = vmatprep.subr.mxu0 0.0
    %v636 = vand.u32 %v61, 4294901760
    %637 = vmatpush1.msra.mxu0 %v636
    %638 = vmatprep.subr.mxu0 0.0
    %v639 = vand.u32 %v62, 4294901760
    %640 = vmatpush1.msra.mxu0 %v639
    %641 = vmatprep.subr.mxu0 0.0
    %v642 = vand.u32 %v63, 4294901760
    %643 = vmatpush1.msra.mxu0 %v642
    %644 = vmatprep.subr.mxu0 0.0
    %v645 = vand.u32 %v64, 4294901760
    %646 = vmatpush1.msra.mxu0 %v645
    %647 = vmatprep.subr.mxu0 0.0
    %v648 = vand.u32 %v65, 4294901760
    %649 = vmatpush1.msra.mxu0 %v648
    %650 = vmatprep.subr.mxu0 0.0
    %v651 = vand.u32 %v66, 4294901760
    %652 = vmatpush1.msra.mxu0 %v651
    %653 = vmatprep.subr.mxu0 0.0
    %v654 = vand.u32 %v67, 4294901760
    %655 = vmatpush1.msra.mxu0 %v654
    %656 = vmatprep.subr.mxu0 0.0
    %v657 = vand.u32 %v68, 4294901760
    %658 = vmatpush1.msra.mxu0 %v657
    %659 = vmatprep.subr.mxu0 0.0
    %v660 = vand.u32 %v69, 4294901760
    %661 = vmatpush1.msra.mxu0 %v660
    %662 = vmatprep.subr.mxu0 0.0
    %v663 = vand.u32 %v70, 4294901760
    %664 = vmatpush1.msra.mxu0 %v663
    %665 = vmatprep.subr.mxu0 0.0
    %v666 = vand.u32 %v71, 4294901760
    %667 = vmatpush1.msra.mxu0 %v666
    %668 = vmatprep.subr.mxu0 0.0
    %v669 = vand.u32 %v72, 4294901760
    %670 = vmatpush1.msra.mxu0 %v669
    %671 = vmatprep.subr.mxu0 0.0
    %v672 = vand.u32 %v73, 4294901760
    %673 = vmatpush1.msra.mxu0 %v672
    %674 = vmatprep.subr.mxu0 0.0
    %v675 = vand.u32 %v74, 4294901760
    %676 = vmatpush1.msra.mxu0 %v675
    %677 = vmatprep.subr.mxu0 0.0
    %678 = vmatpush1.msra.mxu0 0.0
    %679 = vmatprep.subr.mxu0 0.0
    %680 = vmatpush1.msra.mxu0 0.0
    %681 = vmatprep.subr.mxu0 0.0
    %682 = vmatpush1.msra.mxu0 0.0
    %683 = vmatprep.subr.mxu0 0.0
    %684 = vmatpush1.msra.mxu0 0.0
    %685 = vmatprep.subr.mxu0 0.0
    %686 = vmatpush1.msra.mxu0 0.0
    %687 = vmatprep.subr.mxu0 0.0
    %688 = vmatpush1.msra.mxu0 0.0
    %689 = vmatprep.subr.mxu0 0.0
    %690 = vmatpush1.msra.mxu0 0.0
    %691 = vmatprep.subr.mxu0 0.0
    %692 = vmatpush1.msra.mxu0 0.0
    %693 = vmatprep.subr.mxu0 0.0
    %694 = vmatpush1.msra.mxu0 0.0
    %695 = vmatprep.subr.mxu0 0.0
    %696 = vmatpush1.msra.mxu0 0.0
    %697 = vmatprep.subr.mxu0 0.0
    %698 = vmatpush1.msra.mxu0 0.0
    %699 = vmatprep.subr.mxu0 0.0
    %700 = vmatpush1.msra.mxu0 0.0
    %701 = vmatprep.subr.mxu0 0.0
    %702 = vmatpush1.msra.mxu0 0.0
    %703 = vmatprep.subr.mxu0 0.0
    %704 = vmatpush1.msra.mxu0 0.0
    %705 = vmatprep.subr.mxu0 0.0
    %706 = vmatpush1.msra.mxu0 0.0
    %707 = vmatprep.subr.mxu0 0.0
    %708 = vmatpush1.msra.mxu0 0.0
    %709 = vmatprep.mubr.f32.mxu0 0.0
    %v710 = vand.u32 %v58, 4294901760
    %711 = vmatmul.mubr.f32.gmra.mrb[0].mxu0 %v710
    %v712 = vpop.f32.mrb[0].mxu0
    %v713 = vadd.f32 %v626, %v712
    %v714 = vpop.f32.mrb[0].mxu0
    %715 = vdwg.mxu0
    %v716 = vadd.f32 %v57, %v713
    %717 = vst [vmem:[#allocation2] sm:$0xff] %v716
    // Predicated region
    $region30: #{forward.1} parent=1 // pred_check
      %p718 = pneg %p52
    $region31: #{forward.1} parent=1 // pred_check_branch
      %720 = sbr.rel (%p718) target = $region33
    $region32: #{forward.1} parent=1 // pred_region
      %v721 = vld [vmem:[#allocation2] sm:$0xff]
      %v722 = vld [vmem:[#allocation8] sm:$0x1]
      %v724 = vlaneseq
      %v725 = vshrl.u32 %v724, 7
      %v726 = vsub.s32 0, %v725
      %v727 = vrot.slane %v722, %v726
      %v729 = vadd.f32 %v721, %v727
      %v730 = vmax.f32 %v729, 0.0
      %731 = vst [vmem:[#allocation9] sm:$0xff] %v730
    $region33: #{forward.1} parent=1 // pred_fallthru
      _
    // Predicated region
    $region34: #{forward.1} parent=1 // pred_check
      _
    $region35: #{forward.1} parent=1 // pred_check_branch
      %733 = sbr.rel (0) target = $region37
    $region36: #{forward.1} parent=1 // pred_region
      %s735 = ssub.s32 128, 128
      %736 = vsyncadd [#allocation5], %s735
      %s738 = sshll.u32 [#allocation9], 4
      %s739 = int_to_ptr.vmem [resolvable:$true] %s738
      %741 = dma.vmem_to_hbm [thread:$0]  %s739, 128, %s3, [#allocation5]
    $region37: #{forward.1} parent=1 // pred_fallthru
      _
    // Predicated region
    $region38: #{forward.1} parent=1 // pred_check
      _
    $region39: #{forward.1} parent=1 // pred_check_branch
      %743 = sbr.rel (0) target = $region41
    $region40: #{forward.1} parent=1 // pred_region
      %744 = dma.done [#allocation5], 128
    $region41: #{forward.1} parent=1 // pred_fallthru
      _
    %745 = vsyncpa [#allocation4], 1
    %746 = vsyncpa [#allocation7], 1
    %747 = vsyncpa [#allocation5], 1

</llo_original>
